<compile_context>
chip_gen: v7x
topology: tpu7x:2x2x1
jax: 0.10.0
libtpu: 0.0.40
codegen_flags: <defaults>
</compile_context>

<pallas_src>
import functools

import jax
import jax.numpy as jnp
from jax.experimental import pallas as pl
from jax.experimental.pallas import tpu as pltpu


def _stop_conv_kernel(x_ref, w_ref, b_ref, o_ref, *, use_mxu):
    # x_ref: (bn, Cin, tm)  pixels of bn images (native dtype)
    # w_ref: (Cout, Cin)    1x1 conv weight (native dtype)
    # b_ref: (Cout, 1)      bias, f32
    # o_ref: (bn, Cout, tm)
    bn, cin, _ = x_ref.shape
    bias = b_ref[...]                                  # (Cout, 1) f32

    if not use_mxu:
        w = w_ref[...].astype(jnp.float32)             # tiny (Cout, Cin)

    for b in range(bn):                                # bn is small & static
        if use_mxu:
            # MXU path: native-dtype operands, f32 accumulation on the MXU.
            acc = jax.lax.dot_general(
                w_ref[...], x_ref[b],
                (((1,), (0,)), ((), ())),
                preferred_element_type=jnp.float32)    # (Cout, tm)
        else:
            # VPU path: unrolled contraction over Cin with per-channel loads
            # from the ref (no (Cin, tm) f32 materialization of the x tile).
            acc = w[:, 0:1] * x_ref[b, 0:1, :].astype(jnp.float32)
            for c in range(1, cin):
                acc = acc + w[:, c:c + 1] * x_ref[b, c:c + 1, :].astype(jnp.float32)

        acc = acc + bias                               # bias broadcasts over lanes
        # sigmoid(x) = 0.5 * tanh(0.5 * x) + 0.5  -> single EUP op per element
        o_ref[b] = (0.5 * jnp.tanh(0.5 * acc) + 0.5).astype(o_ref.dtype)


def _round_up(v, m):
    return -(-v // m) * m


def stop_conv_forward(x_nchw, weight, bias, *, target_step_bytes=4 * 1024 * 1024):
    """Conv2d(kernel_size=1) + Sigmoid.

    x_nchw: (N, Cin, H, W); weight: (Cout, Cin, 1, 1); bias: (Cout,).
    """
    N, Cin, H, W = x_nchw.shape
    Cout = weight.shape[0]
    HW = H * W
    itemsize = jnp.dtype(x_nchw.dtype).itemsize

    # ---- hardware-aware VMEM budget --------------------------------------
    try:
        vmem_cap = int(pltpu.get_tpu_info().vmem_capacity_bytes)
    except Exception:
        vmem_cap = 64 * 1024 * 1024            # v7x physical VMEM (the low one)
    vmem_limit = min(vmem_cap // 2, 64 * 1024 * 1024)   # scoped limit we request
    tile_budget = vmem_limit // 2                        # headroom for temporaries

    # VPU vs MXU cutoff: v6e/v7x MXUs are 256-wide, so small contractions are
    # better (and free, in this mem-bound regime) on the VPU; v5e's 4x128 MXUs
    # tolerate smaller contractions so its threshold stays low.
    try:
        is_v5 = "v5" in jax.devices()[0].device_kind.lower()
    except Exception:
        is_v5 = False
    use_mxu = Cin > (16 if is_v5 else 64)

    # ---- tile selection ----------------------------------------------------
    # VMEM bytes per pixel*image: double-buffered in+out blocks + f32 acc.
    per_px_vmem = 2 * (Cin + Cout) * itemsize + 4 * Cout
    # HBM traffic per pixel*image.
    per_px_hbm = (Cin + Cout) * itemsize
    # Target pixels*images per grid step (~4 MiB HBM traffic amortizes the
    # ~0.35 us / ~600 cycle per-step overhead), capped by the VMEM budget.
    tgt_px = max(128, min(target_step_bytes // per_px_hbm,
                          tile_budget // per_px_vmem))

    if HW > tgt_px:
        # Large image: tile the pixel axis (multiple of 128 -> lane aligned,
        # last partial block is clipped/masked by Pallas).
        bn = 1
        tm = max(128, (tgt_px // 128) * 128)
    else:
        # Small image: take the full pixel axis and fold several images into
        # one grid step (latency-bound regime otherwise).
        tm = HW
        bn = max(1, min(N, tgt_px // max(HW, 1)))
        while N % bn != 0:        # keep batch blocks exact (bn divides N)
            bn -= 1

    grid_n = pl.cdiv(N, bn)
    grid_m = pl.cdiv(HW, tm)

    # v7x has 2 TensorCores sharing HBM: guarantee >= 2 parallel grid items
    # (one extra ~0.35us step on single-core v5e/v6e, up to ~2x win on v7x).
    if grid_n * grid_m == 1:
        if N >= 2:
            bn = (N + 1) // 2
            while N % bn != 0:
                bn -= 1
            grid_n = pl.cdiv(N, bn)
        elif HW >= 256:
            tm = _round_up(-(-HW // 2), 128)
            grid_m = pl.cdiv(HW, tm)

    # ---- reshape-only data prep (no transpose, no pad, no extra HBM pass) --
    x3d = x_nchw.reshape(N, Cin, HW)
    w2d = weight.reshape(Cout, Cin)                       # keep native dtype
    b2d = bias.reshape(Cout, 1).astype(jnp.float32)

    cost = pl.CostEstimate(
        flops=2 * N * HW * Cin * Cout,
        transcendentals=N * HW * Cout,                    # one tanh per output elem
        bytes_accessed=(x3d.size + N * Cout * HW) * itemsize
        + w2d.size * w2d.dtype.itemsize
        + b2d.size * 4,
    )

    kernel = functools.partial(_stop_conv_kernel, use_mxu=use_mxu)

    out3d = pl.pallas_call(
        kernel,
        out_shape=jax.ShapeDtypeStruct((N, Cout, HW), x_nchw.dtype),
        grid_spec=pltpu.PrefetchScalarGridSpec(
            num_scalar_prefetch=0,
            grid=(grid_n, grid_m),
            in_specs=[
                pl.BlockSpec((bn, Cin, tm), lambda n, m: (n, 0, m)),
                pl.BlockSpec((Cout, Cin), lambda n, m: (0, 0)),
                pl.BlockSpec((Cout, 1), lambda n, m: (0, 0)),
            ],
            out_specs=pl.BlockSpec((bn, Cout, tm), lambda n, m: (n, 0, m)),
        ),
        compiler_params=pltpu.CompilerParams(
            dimension_semantics=("parallel", "parallel"),
            vmem_limit_bytes=int(vmem_limit),
        ),
        cost_estimate=cost,
    )(x3d, w2d, b2d)

    return out3d.reshape(N, Cout, H, W)


def _reference(x_nchw, weight, bias):
    # Pure-JAX reference of Conv2d(kernel_size=1) + Sigmoid for validation.
    w2d = weight.reshape(weight.shape[0], weight.shape[1])   # (Cout, Cin)
    y = jnp.einsum("nchw,oc->nohw", x_nchw, w2d) + bias[None, :, None, None]
    return jax.nn.sigmoid(y)


if __name__ == "__main__":
    key = jax.random.PRNGKey(0)
    k_x, k_w, k_b = jax.random.split(key, 3)

    N, Cin, H, W = 2, 4, 16, 16
    Cout = 8

    x = jax.random.normal(k_x, (N, Cin, H, W), dtype=jnp.float32)
    # Deterministic parameter init (mimics PyTorch kaiming-uniform-ish scale).
    bound = 1.0 / (Cin ** 0.5)
    weight = jax.random.uniform(k_w, (Cout, Cin, 1, 1), jnp.float32, -bound, bound)
    bias = jax.random.uniform(k_b, (Cout,), jnp.float32, -bound, bound)

    out = stop_conv_forward(x, weight, bias)
    jax.block_until_ready(out)

    ref = _reference(x, weight, bias)
    assert out.shape == (N, Cout, H, W), out.shape
    assert jnp.allclose(out, ref, atol=2e-5, rtol=2e-5), "mismatch vs reference"

    print("KERNEL_OK")
</pallas_src>

<mosaic_0001>
module attributes {stable_mosaic.version = 11 : i64} {
  func.func @_stop_conv_kernel(%arg0: i32, %arg1: i32, %arg2: memref<1x4x256xf32, #tpu.memory_space<vmem>>, %arg3: memref<8x4xf32, #tpu.memory_space<vmem>>, %arg4: memref<8x1xf32, #tpu.memory_space<vmem>>, %arg5: memref<1x8x256xf32, #tpu.memory_space<vmem>>) attributes {dimension_semantics = [#tpu.dimension_semantics<parallel>, #tpu.dimension_semantics<parallel>], iteration_bounds = array<i64: 2, 1>, scalar_prefetch = 0 : i64, scratch_operands = 0 : i64, tpu.core_type = #tpu.core_type<tc>, window_params = [{transform_indices = @transform_0, window_bounds = array<i64: 1, 4, 256>}, {pipeline_mode = #tpu.pipeline_mode<synchronous>, transform_indices = @transform_1, window_bounds = array<i64: 8, 4>}, {pipeline_mode = #tpu.pipeline_mode<synchronous>, transform_indices = @transform_2, window_bounds = array<i64: 8, 1>}, {transform_indices = @transform_3, window_bounds = array<i64: 1, 8, 256>}]} {
    %c0 = arith.constant 0 : index
    %c0_0 = arith.constant 0 : index
    %0 = vector.load %arg4[%c0, %c0_0] : memref<8x1xf32, #tpu.memory_space<vmem>>, vector<8x1xf32>
    %c0_1 = arith.constant 0 : index
    %c0_2 = arith.constant 0 : index
    %1 = vector.load %arg3[%c0_1, %c0_2] : memref<8x4xf32, #tpu.memory_space<vmem>>, vector<8x4xf32>
    %2 = vector.extract_strided_slice %1 {offsets = [0, 0], sizes = [8, 1], strides = [1, 1]} : vector<8x4xf32> to vector<8x1xf32>
    %c0_3 = arith.constant 0 : index
    %c0_4 = arith.constant 0 : index
    %c0_5 = arith.constant 0 : index
    %3 = vector.load %arg2[%c0_3, %c0_4, %c0_5] : memref<1x4x256xf32, #tpu.memory_space<vmem>>, vector<1x1x256xf32>
    %4 = vector.shape_cast %3 : vector<1x1x256xf32> to vector<1x256xf32>
    %5 = vector.broadcast %2 : vector<8x1xf32> to vector<8x256xf32>
    %6 = vector.broadcast %4 : vector<1x256xf32> to vector<8x256xf32>
    %7 = arith.mulf %5, %6 : vector<8x256xf32>
    %8 = vector.extract_strided_slice %1 {offsets = [0, 1], sizes = [8, 1], strides = [1, 1]} : vector<8x4xf32> to vector<8x1xf32>
    %c0_6 = arith.constant 0 : index
    %c1 = arith.constant 1 : index
    %c0_7 = arith.constant 0 : index
    %9 = vector.load %arg2[%c0_6, %c1, %c0_7] : memref<1x4x256xf32, #tpu.memory_space<vmem>>, vector<1x1x256xf32>
    %10 = vector.shape_cast %9 : vector<1x1x256xf32> to vector<1x256xf32>
    %11 = vector.broadcast %8 : vector<8x1xf32> to vector<8x256xf32>
    %12 = vector.broadcast %10 : vector<1x256xf32> to vector<8x256xf32>
    %13 = arith.mulf %11, %12 : vector<8x256xf32>
    %14 = arith.addf %7, %13 : vector<8x256xf32>
    %15 = vector.extract_strided_slice %1 {offsets = [0, 2], sizes = [8, 1], strides = [1, 1]} : vector<8x4xf32> to vector<8x1xf32>
    %c0_8 = arith.constant 0 : index
    %c2 = arith.constant 2 : index
    %c0_9 = arith.constant 0 : index
    %16 = vector.load %arg2[%c0_8, %c2, %c0_9] : memref<1x4x256xf32, #tpu.memory_space<vmem>>, vector<1x1x256xf32>
    %17 = vector.shape_cast %16 : vector<1x1x256xf32> to vector<1x256xf32>
    %18 = vector.broadcast %15 : vector<8x1xf32> to vector<8x256xf32>
    %19 = vector.broadcast %17 : vector<1x256xf32> to vector<8x256xf32>
    %20 = arith.mulf %18, %19 : vector<8x256xf32>
    %21 = arith.addf %14, %20 : vector<8x256xf32>
    %22 = vector.extract_strided_slice %1 {offsets = [0, 3], sizes = [8, 1], strides = [1, 1]} : vector<8x4xf32> to vector<8x1xf32>
    %c0_10 = arith.constant 0 : index
    %c3 = arith.constant 3 : index
    %c0_11 = arith.constant 0 : index
    %23 = vector.load %arg2[%c0_10, %c3, %c0_11] : memref<1x4x256xf32, #tpu.memory_space<vmem>>, vector<1x1x256xf32>
    %24 = vector.shape_cast %23 : vector<1x1x256xf32> to vector<1x256xf32>
    %25 = vector.broadcast %22 : vector<8x1xf32> to vector<8x256xf32>
    %26 = vector.broadcast %24 : vector<1x256xf32> to vector<8x256xf32>
    %27 = arith.mulf %25, %26 : vector<8x256xf32>
    %28 = arith.addf %21, %27 : vector<8x256xf32>
    %29 = vector.broadcast %0 : vector<8x1xf32> to vector<8x256xf32>
    %30 = arith.addf %28, %29 : vector<8x256xf32>
    %cst = arith.constant 5.000000e-01 : f32
    %31 = vector.broadcast %cst : f32 to vector<8x256xf32>
    %32 = arith.mulf %31, %30 : vector<8x256xf32>
    %33 = math.tanh %32 : vector<8x256xf32>
    %cst_12 = arith.constant 5.000000e-01 : f32
    %34 = vector.broadcast %cst_12 : f32 to vector<8x256xf32>
    %35 = arith.mulf %34, %33 : vector<8x256xf32>
    %cst_13 = arith.constant 5.000000e-01 : f32
    %36 = vector.broadcast %cst_13 : f32 to vector<8x256xf32>
    %37 = arith.addf %35, %36 : vector<8x256xf32>
    %c0_14 = arith.constant 0 : index
    %c0_15 = arith.constant 0 : index
    %c0_16 = arith.constant 0 : index
    %38 = vector.load %arg5[%c0_14, %c0_15, %c0_16] : memref<1x8x256xf32, #tpu.memory_space<vmem>>, vector<1x8x256xf32>
    %39 = vector.shape_cast %38 : vector<1x8x256xf32> to vector<8x256xf32>
    %40 = vector.shape_cast %37 : vector<8x256xf32> to vector<1x8x256xf32>
    tpu.vector_store %arg5[%c0_14, %c0_15, %c0_16], %40 {strides = array<i32>} : memref<1x8x256xf32, #tpu.memory_space<vmem>>, vector<1x8x256xf32>,
    return
  }
  func.func @transform_0(%arg0: i32, %arg1: i32) -> (i32, i32, i32) {
    %c0_i32 = arith.constant 0 : i32
    %c0_i32_0 = arith.constant 0 : i32
    return %arg0, %c0_i32, %arg1 : i32, i32, i32
  }
  func.func @transform_1(%arg0: i32, %arg1: i32) -> (i32, i32) {
    %c0_i32 = arith.constant 0 : i32
    %c0_i32_0 = arith.constant 0 : i32
    %c0_i32_1 = arith.constant 0 : i32
    return %c0_i32, %c0_i32_0 : i32, i32
  }
  func.func @transform_2(%arg0: i32, %arg1: i32) -> (i32, i32) {
    %c0_i32 = arith.constant 0 : i32
    %c0_i32_0 = arith.constant 0 : i32
    %c0_i32_1 = arith.constant 0 : i32
    return %c0_i32, %c0_i32_0 : i32, i32
  }
  func.func @transform_3(%arg0: i32, %arg1: i32) -> (i32, i32, i32) {
    %c0_i32 = arith.constant 0 : i32
    %c0_i32_0 = arith.constant 0 : i32
    return %arg0, %c0_i32, %arg1 : i32, i32, i32
  }
}

</mosaic_0001>

<llo_original>
// kernel: tpu_custom_call.1
$region0: #{tpu_custom_call.1}
  #allocation0 [shape = 'u32[]', space=smem, size = 0x4, offset = 0x4, fixed_abs, tag = 'smem constant byte address 0x4 - core index']
  #allocation1 [shape = 'u32[144,128]{1,0:T(1,128)}', space=vmem, size = 0x12000, scoped, tag = 'internal scratch']
  %s0 = inlined_call_operand.vmem [shape: f32[2,4,256], index: 0, kind: input, shape index: {}]
  %s1 = inlined_call_operand.vmem [shape: f32[8,4], index: 1, kind: input, shape index: {}]
  %s2 = inlined_call_operand.vmem [shape: f32[8,1], index: 2, kind: input, shape index: {}]
  %s3 = inlined_call_operand.hbm [shape: f32[2,8,256], index: 3, kind: output, shape index: {}]
  %s4 = sld [smem:[#allocation0]]
  $region45: #{tpu_custom_call.1} parent=0
    _
  %s6 = ssub.s32 1, %s4
  %s7 = scalar_select 0, %s6, %s4
  $region1: #{tpu_custom_call.1} parent=0
    #allocation2 [shape = 'u8[16384]{0}', space=vmem, size = 0x4000, scoped, tag = 'output window, operand 0']
    #allocation3 [shape = 's32[2]{0}', space=sflag, size = 0x8, scoped, tag = 'scoped memory for tpu_custom_call.1']
    %8 = vsyncpa [#allocation3], 0
    %s9 = scalar_lea.sflag [#allocation3], 1
    %10 = vsyncpa %s9, 0
    loop: start=0, step=1, limit=4
    $region2: #{tpu_custom_call.1} parent=1 // loop_pre_header
      _
    $region3: #{tpu_custom_call.1} parent=1 // loop_header
      %s12 = sphi 0, %s16
      %p13 = scmp.ge.s32.totalorder %s12, 4
      %s19 = sphi 0, %s31
      %s20 = sphi 0, %s27
      %s21 = sphi 0, %s19
      %s22 = sphi 0, %s20
      %s23 = sphi 0, %s21
      %s24 = sphi 0, %s22
      %s36 = sphi 0, %s38
      %s39 = sphi 0, %s36
      %s40 = sphi 0, %s39
      %s56 = sphi 0, %s40
      %s60 = sphi 0, %s60
      %s62 = sphi 0, %s60
      %s63 = sphi 0, %s62
      %s77 = sphi 0, %s63
      %s81 = sphi 0, %s81
      %s83 = sphi 0, %s81
      %s84 = sphi 0, %s83
      %s98 = sphi 0, %s84
      %s106 = sphi 0, %s108
      %s109 = sphi 0, %s106
      %s110 = sphi 0, %s109
      %s126 = sphi 0, %s110
    $region4: #{tpu_custom_call.1} parent=1 // loop_header_branch
      %15 = sbr.rel (%p13) target = $region8
    $region5: #{tpu_custom_call.1} parent=1 // loop_body
      %s17 = ssub.s32 %s12, 1
      %s18 = ssub.s32 %s12, 2
      %s25 = sadd.s32 1, %s20
      %p26 = scmp.ge.s32.totalorder %s25, 1
      %s27 = scalar_select %p26, 0, %s25
      %s28 = sadd.s32 1, %s19
      %s29 = scalar_select %p26, %s28, %s19
      %p30 = scmp.ge.s32.totalorder %s29, 2
      %s31 = scalar_select %p30, 0, %s29
      %s32 = ssub.s32 %s19, %s31
      %s33 = ssub.s32 %s20, %s27
      %s34 = sor.u32 %s32, %s33
      %p35 = scmp.eq.s32.totalorder %s34, 0
      %s37 = sadd.s32 %s36, 1
      %s38 = scalar_select %p35, %s36, %s37
      %p41 = pneg %p35
      %p42 = scmp.eq.s32.totalorder %s12, 1
      %p43 = por %p41, %p42
      %p44 = scmp.ne.s32.totalorder %s36, %s39
      %p45 = scmp.eq.s32.totalorder %s12, 0
      %p46 = por %p44, %p45
      %p47 = scmp.ne.s32.totalorder %s36, %s39
      %p48 = scmp.eq.s32.totalorder %s17, 1
      %p49 = por %p47, %p48
      %p50 = scmp.ne.s32.totalorder %s39, %s40
      %p51 = scmp.eq.s32.totalorder %s17, 0
      %p52 = por %p50, %p51
      %p53 = scmp.ne.s32.totalorder %s39, %s40
      %p54 = scmp.eq.s32.totalorder %s18, 1
      %p55 = por %p53, %p54
      %p57 = scmp.ne.s32.totalorder %s40, %s56
      %p58 = scmp.eq.s32.totalorder %s18, 0
      %p59 = por %p57, %p58
      %s61 = sadd.s32 %s60, 1
      %p64 = scmp.eq.s32.totalorder %s12, 1
      %p65 = scmp.ne.s32.totalorder %s60, %s62
      %p66 = scmp.eq.s32.totalorder %s12, 0
      %p67 = por %p65, %p66
      %p68 = scmp.ne.s32.totalorder %s60, %s62
      %p69 = scmp.eq.s32.totalorder %s17, 1
      %p70 = por %p68, %p69
      %p71 = scmp.ne.s32.totalorder %s62, %s63
      %p72 = scmp.eq.s32.totalorder %s17, 0
      %p73 = por %p71, %p72
      %p74 = scmp.ne.s32.totalorder %s62, %s63
      %p75 = scmp.eq.s32.totalorder %s18, 1
      %p76 = por %p74, %p75
      %p78 = scmp.ne.s32.totalorder %s63, %s77
      %p79 = scmp.eq.s32.totalorder %s18, 0
      %p80 = por %p78, %p79
      %s82 = sadd.s32 %s81, 1
      %p85 = scmp.eq.s32.totalorder %s12, 1
      %p86 = scmp.ne.s32.totalorder %s81, %s83
      %p87 = scmp.eq.s32.totalorder %s12, 0
      %p88 = por %p86, %p87
      %p89 = scmp.ne.s32.totalorder %s81, %s83
      %p90 = scmp.eq.s32.totalorder %s17, 1
      %p91 = por %p89, %p90
      %p92 = scmp.ne.s32.totalorder %s83, %s84
      %p93 = scmp.eq.s32.totalorder %s17, 0
      %p94 = por %p92, %p93
      %p95 = scmp.ne.s32.totalorder %s83, %s84
      %p96 = scmp.eq.s32.totalorder %s18, 1
      %p97 = por %p95, %p96
      %p99 = scmp.ne.s32.totalorder %s84, %s98
      %p100 = scmp.eq.s32.totalorder %s18, 0
      %p101 = por %p99, %p100
      %s102 = ssub.s32 %s19, %s31
      %s103 = ssub.s32 %s20, %s27
      %s104 = sor.u32 %s102, %s103
      %p105 = scmp.eq.s32.totalorder %s104, 0
      %s107 = sadd.s32 %s106, 1
      %s108 = scalar_select %p105, %s106, %s107
      %p111 = pneg %p105
      %p112 = scmp.eq.s32.totalorder %s12, 1
      %p113 = por %p111, %p112
      %p114 = scmp.ne.s32.totalorder %s106, %s109
      %p115 = scmp.eq.s32.totalorder %s12, 0
      %p116 = por %p114, %p115
      %p117 = scmp.ne.s32.totalorder %s106, %s109
      %p118 = scmp.eq.s32.totalorder %s17, 1
      %p119 = por %p117, %p118
      %p120 = scmp.ne.s32.totalorder %s109, %s110
      %p121 = scmp.eq.s32.totalorder %s17, 0
      %p122 = por %p120, %p121
      %p123 = scmp.ne.s32.totalorder %s109, %s110
      %p124 = scmp.eq.s32.totalorder %s18, 1
      %p125 = por %p123, %p124
      %p127 = scmp.ne.s32.totalorder %s110, %s126
      %p128 = scmp.eq.s32.totalorder %s18, 0
      %p129 = por %p127, %p128
      %p130 = scmp.le.s32.totalorder 1, %s12
      %p131 = scmp.lt.s32.totalorder %s12, 3
      %p132 = pnand %p130, %p131
      %p133 = pneg %p132
      // Predicated region
      $region9: #{tpu_custom_call.1} parent=5 // pred_check
        _
      $region10: #{tpu_custom_call.1} parent=5 // pred_check_branch
        %135 = sbr.rel (%p132) target = $region12
      $region11: #{tpu_custom_call.1} parent=5 // pred_region
        %s136 = ssub.s32 %s12, 1
        // Predicated region
        $region13: #{tpu_custom_call.1} parent=11 // pred_check
          %p137 = pneg %p73
        $region14: #{tpu_custom_call.1} parent=11 // pred_check_branch
          %139 = sbr.rel (%p137) target = $region16
        $region15: #{tpu_custom_call.1} parent=11 // pred_region
          _
        $region16: #{tpu_custom_call.1} parent=11 // pred_fallthru
          _
        // Predicated region
        $region17: #{tpu_custom_call.1} parent=11 // pred_check
          %p140 = pneg %p94
        $region18: #{tpu_custom_call.1} parent=11 // pred_check_branch
          %142 = sbr.rel (%p140) target = $region20
        $region19: #{tpu_custom_call.1} parent=11 // pred_region
          _
        $region20: #{tpu_custom_call.1} parent=11 // pred_fallthru
          _
      $region12: #{tpu_custom_call.1} parent=5 // pred_fallthru
        _
      %p143 = scmp.lt.s32.totalorder %s12, 2
      // Predicated region
      $region21: #{tpu_custom_call.1} parent=5 // pred_check
        %p144 = pneg %p143
      $region22: #{tpu_custom_call.1} parent=5 // pred_check_branch
        %146 = sbr.rel (%p144) target = $region24
      $region23: #{tpu_custom_call.1} parent=5 // pred_region
        // Predicated region
        $region25: #{tpu_custom_call.1} parent=23 // pred_check
          %p147 = pneg %p46
        $region26: #{tpu_custom_call.1} parent=23 // pred_check_branch
          %149 = sbr.rel (%p147) target = $region28
        $region27: #{tpu_custom_call.1} parent=23 // pred_region
          %s150 = smul.u32 2, %s20
          %p151 = scmp.lt.s32.totalorder %s19, 1
          %s152 = scalar_select %p151, %s19, 1
          %p153 = scmp.lt.s32.totalorder %s150, 1
          %s154 = scalar_select %p153, %s150, 1
          %s155 = smul.addr %s152, 2
          %s156 = sadd.s32 %s154, %s155
          %s157 = smul.addr %s156, 4
          %s158 = scalar_lea.vmem %s0, %s157
          %s159 = smul.u32 2, %s20
        $region28: #{tpu_custom_call.1} parent=23 // pred_fallthru
          _
      $region24: #{tpu_custom_call.1} parent=5 // pred_fallthru
        _
      %p160 = scmp.le.s32.totalorder 1, %s12
      %p161 = scmp.lt.s32.totalorder %s12, 3
      %p162 = pnand %p160, %p161
      %p163 = pneg %p162
      // Predicated region
      $region29: #{tpu_custom_call.1} parent=5 // pred_check
        _
      $region30: #{tpu_custom_call.1} parent=5 // pred_check_branch
        %165 = sbr.rel (%p162) target = $region32
      $region31: #{tpu_custom_call.1} parent=5 // pred_region
        %s166 = ssub.s32 %s12, 1
        %s167 = smul.u32 2, %s22
        %p168 = scmp.lt.s32.totalorder %s21, 1
        %s169 = scalar_select %p168, %s21, 1
        %p170 = scmp.lt.s32.totalorder %s167, 1
        %s171 = scalar_select %p170, %s167, 1
        %s172 = smul.addr %s169, 2
        %s173 = sadd.s32 %s171, %s172
        %s174 = smul.addr %s173, 4
        %s175 = scalar_lea.vmem %s0, %s174
        %p176 = pneg %p52
        %p177 = pneg %p49
        %p178 = pneg %p73
        %p179 = pneg %p70
        %p180 = pneg %p94
        %p181 = pneg %p91
        %p182 = pneg %p122
        %p183 = pneg %p119
        %s184 = sand.u32 %s109, 1
        %s185 = scalar_lea.sflag [#allocation3], %s184
        %s186 = sand.u32 %s109, 1
        %s187 = smul.addr %s186, 16
        %s188 = scalar_lea.vmem [#allocation2], %s187
        %s189 = smul.u32 2, %s22
        %p190 = scmp.lt.s32.totalorder %s21, 1
        %s191 = scalar_select %p190, %s21, 1
        %p192 = scmp.lt.s32.totalorder %s189, 1
        %s193 = scalar_select %p192, %s189, 1
        %s194 = smul.addr %s191, 2
        %s195 = sadd.s32 %s193, %s194
        %s196 = smul.addr %s195, 4
        %s197 = scalar_lea.vmem %s0, %s196
        %s198 = smul.u32 2, %s22
        %s199 = smul.u32 2, %s22
        %v200 = vld [vmem:[%s2] sm:$0xff]
        %v201 = vld [vmem:[%s1] sm:$0xff]
        %v202 = vld [vmem:[%s197] ss:$4 sm:$0x3]
        %204 = vset.pattern.permute.xlu0 0
        %205 = vperm.xlu0 %204, %v201
        %v206 = vpop.permute.xlu0 %205
        %v209 = vlaneseq
        %v210 = vshrl.u32 %v209, 7
        %v211 = vsub.s32 0, %v210
        %v212 = vrot.slane %v202, %v211
        %v213 = vlaneseq
        %v214 = vshrl.u32 %v213, 7
        %v215 = vsub.s32 1, %v214
        %v216 = vrot.slane %v202, %v215
        %v219 = vmul.f32 %v206, %v212
        %v220 = vmul.f32 %v206, %v216
        %s221 = scalar_lea.vmem %s197, 1
        %v222 = vld [vmem:[%s221] ss:$4 sm:$0x3]
        %223 = vset.pattern.permute.xlu0 1
        %224 = vperm.xlu0 %223, %v201
        %v225 = vpop.permute.xlu0 %224
        %v228 = vlaneseq
        %v229 = vshrl.u32 %v228, 7
        %v230 = vsub.s32 0, %v229
        %v231 = vrot.slane %v222, %v230
        %v232 = vlaneseq
        %v233 = vshrl.u32 %v232, 7
        %v234 = vsub.s32 1, %v233
        %v235 = vrot.slane %v222, %v234
        %v238 = vmul.f32 %v225, %v231
        %v239 = vmul.f32 %v225, %v235
        %v240 = vadd.f32 %v219, %v238
        %v241 = vadd.f32 %v220, %v239
        %s242 = scalar_lea.vmem %s197, 2
        %v243 = vld [vmem:[%s242] ss:$4 sm:$0x3]
        %244 = vset.pattern.permute.xlu0 2
        %245 = vperm.xlu0 %244, %v201
        %v246 = vpop.permute.xlu0 %245
        %v249 = vlaneseq
        %v250 = vshrl.u32 %v249, 7
        %v251 = vsub.s32 0, %v250
        %v252 = vrot.slane %v243, %v251
        %v253 = vlaneseq
        %v254 = vshrl.u32 %v253, 7
        %v255 = vsub.s32 1, %v254
        %v256 = vrot.slane %v243, %v255
        %v259 = vmul.f32 %v246, %v252
        %v260 = vmul.f32 %v246, %v256
        %v261 = vadd.f32 %v240, %v259
        %v262 = vadd.f32 %v241, %v260
        %s263 = scalar_lea.vmem %s197, 3
        %v264 = vld [vmem:[%s263] ss:$4 sm:$0x3]
        %265 = vset.pattern.permute.xlu0 3
        %266 = vperm.xlu0 %265, %v201
        %v267 = vpop.permute.xlu0 %266
        %v270 = vlaneseq
        %v271 = vshrl.u32 %v270, 7
        %v272 = vsub.s32 0, %v271
        %v273 = vrot.slane %v264, %v272
        %v274 = vlaneseq
        %v275 = vshrl.u32 %v274, 7
        %v276 = vsub.s32 1, %v275
        %v277 = vrot.slane %v264, %v276
        %v280 = vmul.f32 %v267, %v273
        %v281 = vmul.f32 %v267, %v277
        %v282 = vadd.f32 %v261, %v280
        %v283 = vadd.f32 %v262, %v281
        %285 = vset.pattern.permute.xlu0 0
        %286 = vperm.xlu0 %285, %v200
        %v287 = vpop.permute.xlu0 %286
        %v289 = vadd.f32 %v282, %v287
        %v290 = vadd.f32 %v283, %v287
        %v291 = vmul.f32 %v289, 0.5
        %v292 = vmul.f32 %v290, 0.5
        %v293 = vtanh.pop %v291
        %v294 = vtanh.pop %v292
        %v295 = vmul.f32 %v293, 0.5
        %v296 = vmul.f32 %v294, 0.5
        %v297 = vadd.f32 %v295, 0.5
        %v298 = vadd.f32 %v296, 0.5
        %299 = vst [vmem:[%s188] sm:$0xff] %v297
        %300 = vst [vmem:[%s188 + $0x8] sm:$0xff] %v298
        %s301 = sand.u32 %s109, 1
        %s302 = scalar_lea.sflag [#allocation3], %s301
        %s303 = sand.u32 %s109, 1
        %s304 = smul.addr %s303, 16
        %s305 = scalar_lea.vmem [#allocation2], %s304
        // Predicated region
        $region33: #{tpu_custom_call.1} parent=31 // pred_check
          %p306 = pneg %p119
        $region34: #{tpu_custom_call.1} parent=31 // pred_check_branch
          %308 = sbr.rel (%p306) target = $region36
        $region35: #{tpu_custom_call.1} parent=31 // pred_region
          %s309 = smul.u32 2, %s22
          %s311 = ssub.s32 256, 256
          %312 = vsyncadd %s302, %s311
          %s313 = smul.addr %s21, 2
          %s314 = sadd.s32 %s309, %s313
          %s315 = smul.addr %s314, 128
          %s316 = scalar_lea.hbm %s3, %s315
          %s318 = sshll.u32 %s305, 4
          %s319 = int_to_ptr.vmem [resolvable:$true] %s318
          %321 = dma.vmem_to_hbm [thread:$0]  %s319, 256, %s316, %s302
        $region36: #{tpu_custom_call.1} parent=31 // pred_fallthru
          _
      $region32: #{tpu_custom_call.1} parent=5 // pred_fallthru
        _
      %p322 = scmp.le.s32.totalorder 2, %s12
      // Predicated region
      $region37: #{tpu_custom_call.1} parent=5 // pred_check
        %p323 = pneg %p322
      $region38: #{tpu_custom_call.1} parent=5 // pred_check_branch
        %325 = sbr.rel (%p323) target = $region40
      $region39: #{tpu_custom_call.1} parent=5 // pred_region
        %s326 = ssub.s32 %s12, 2
        // Predicated region
        $region41: #{tpu_custom_call.1} parent=39 // pred_check
          %p327 = pneg %p125
        $region42: #{tpu_custom_call.1} parent=39 // pred_check_branch
          %329 = sbr.rel (%p327) target = $region44
        $region43: #{tpu_custom_call.1} parent=39 // pred_region
          %s330 = sand.u32 %s110, 1
          %s331 = scalar_lea.sflag [#allocation3], %s330
          %s332 = sand.u32 %s110, 1
          %s333 = smul.addr %s332, 16
          %s334 = scalar_lea.vmem [#allocation2], %s333
          %335 = dma.done %s331, 256
        $region44: #{tpu_custom_call.1} parent=39 // pred_fallthru
          _
      $region40: #{tpu_custom_call.1} parent=5 // pred_fallthru
        _
    $region6: #{tpu_custom_call.1} parent=1 // loop_footer
      %s16 = sadd.s32 1, %s12
    $region7: #{tpu_custom_call.1} parent=1 // loop_footer_branch
      %11 = sbr.rel target = $region3
    $region8: #{tpu_custom_call.1} parent=1 // loop_exit
      _
    %336 = vsyncpa [#allocation3], 1
    %s337 = scalar_lea.sflag [#allocation3], 1
    %338 = vsyncpa %s337, 1

</llo_original>
